<compile_context>
chip_gen: v7x
topology: tpu7x:2x2x1
jax: 0.10.0
libtpu: 0.0.40
codegen_flags: <defaults>
</compile_context>

<pallas_src>
import jax
import jax.numpy as jnp
from jax.experimental import pallas as pl
from jax.experimental.pallas import tpu as pltpu


def _critic_kernel(
    xt_ref,    # (S+A, TILE_B) f32   concatenated features, batch on lanes
    w1t_ref,   # (H1, S+A)     compute dtype (W1 transposed)
    b1_ref,    # (H1, 1)       f32
    w2t_ref,   # (H2, H1)      compute dtype (W2 transposed)
    b2_ref,    # (H2, 1)       f32
    w3_ref,    # (1, H2)       f32   (W3 as a row)
    b3_ref,    # (1, 1)        f32
    out_ref,   # (1, TILE_B)   f32   q^T, lane-dense
):
    # Cast the streamed f32 block to the resident weight dtype in-kernel
    # (no-op for the f32 path, frees an HBM pass for the bf16 path).
    xt = xt_ref[...].astype(w1t_ref.dtype)

    # Layer 1 (fused concat already done in the transposed input):
    # h1^T = relu(W1^T @ x^T + b1)   -> (H1, TILE_B), lane-dense.
    h1 = jnp.dot(w1t_ref[...], xt, preferred_element_type=jnp.float32) + b1_ref[...]
    h1 = jnp.maximum(h1, 0.0)

    # Layer 2: h2^T = relu(W2^T @ h1^T + b2)   -> (H2, TILE_B).
    h2 = (
        jnp.dot(w2t_ref[...], h1.astype(w2t_ref.dtype),
                preferred_element_type=jnp.float32)
        + b2_ref[...]
    )
    h2 = jnp.maximum(h2, 0.0)

    # Output layer (out_features == 1): q^T = w3 @ h2^T + b3 -> (1, TILE_B).
    q = jnp.dot(w3_ref[...], h2, preferred_element_type=jnp.float32) + b3_ref[...]
    out_ref[...] = q.astype(out_ref.dtype)


def prepare_params(params, compute_dtype=jnp.bfloat16):
    """One-time parameter prep (hoisted out of the per-call path).

    Transposes W1/W2 for the batch-on-lanes formulation, reshapes biases to
    columns, keeps W3 as an f32 row, and casts matmul weights to compute_dtype.
    """
    return {
        "w1t": jnp.asarray(params["w1"], jnp.float32).T.astype(compute_dtype),  # (H1, S+A)
        "b1": jnp.asarray(params["b1"], jnp.float32).reshape(-1, 1),            # (H1, 1)
        "w2t": jnp.asarray(params["w2"], jnp.float32).T.astype(compute_dtype),  # (H2, H1)
        "b2": jnp.asarray(params["b2"], jnp.float32).reshape(-1, 1),            # (H2, 1)
        "w3": jnp.asarray(params["w3"], jnp.float32).reshape(1, -1),            # (1, H2)
        "b3": jnp.asarray(params["b3"], jnp.float32).reshape(1, 1),             # (1, 1)
    }


def fully_connected_critic_forward(state, action, prepped, *, tile_b=32768):
    """Pallas-fused forward of FullyConnectedCritic.

    state:   (B, state_dim)  float32
    action:  (B, action_dim) float32
    prepped: output of prepare_params
    returns  (B, 1) float32
    """
    B, S = state.shape
    A = action.shape[1]
    H1 = prepped["w1t"].shape[0]
    H2 = prepped["w2t"].shape[0]

    # Batch-on-lanes: hand the kernel x^T of shape (S+A, B). Stays f32 — the
    # (cheap, optional) bf16 cast happens inside the kernel.
    x_t = jnp.concatenate([state, action], axis=1).T  # (S+A, B)

    # --- tile_b selection -------------------------------------------------
    # Large tiles amortize per-grid-step overhead; VMEM cost per step is only
    # ~(inputs + f32 intermediates) ~ a few hundred bytes per batch row.
    tile_b = min(tile_b, B)
    if tile_b < B:
        tile_b = max(128, (tile_b // 128) * 128)  # lane-dim blocks: multiple of 128
    elif B >= 256:
        # Keep the grid length >= 2 so ("parallel",) actually splits the batch
        # across both TensorCores on v7x.
        half = -(-B // 2)
        tile_b = -(-half // 128) * 128
    grid = (pl.cdiv(B, tile_b),)

    def const_spec(arr):
        # Constant block index -> weights stay VMEM-resident, no re-DMA per tile.
        return pl.BlockSpec(arr.shape, lambda i: (0, 0))

    in_specs = [
        pl.BlockSpec((S + A, tile_b), lambda i: (0, i)),  # streamed x^T block
        const_spec(prepped["w1t"]),
        const_spec(prepped["b1"]),
        const_spec(prepped["w2t"]),
        const_spec(prepped["b2"]),
        const_spec(prepped["w3"]),
        const_spec(prepped["b3"]),
    ]
    # Lane-dense output row; reshaped to (B, 1) in the wrapper.
    out_spec = pl.BlockSpec((1, tile_b), lambda i: (0, i))

    weight_bytes = sum(int(v.size) * int(v.dtype.itemsize) for v in prepped.values())
    cost = pl.CostEstimate(
        flops=2 * B * ((S + A) * H1 + H1 * H2 + H2),
        transcendentals=0,
        bytes_accessed=B * (S + A) * x_t.dtype.itemsize + B * 4 + weight_bytes,
    )

    out_row = pl.pallas_call(
        _critic_kernel,
        out_shape=jax.ShapeDtypeStruct((1, B), jnp.float32),
        grid=grid,
        in_specs=in_specs,
        out_specs=out_spec,
        compiler_params=pltpu.CompilerParams(
            dimension_semantics=("parallel",),      # both TCs on v7x; no-op otherwise
            vmem_limit_bytes=48 * 1024 * 1024,      # above v5e's 16 MiB default scoped
        ),
        cost_estimate=cost,
    )(
        x_t,
        prepped["w1t"], prepped["b1"],
        prepped["w2t"], prepped["b2"],
        prepped["w3"], prepped["b3"],
    )
    # (1, B) row-major -> (B, 1); pure reshape, no data reorder.
    return out_row.reshape(B, 1)


def _init_params(key, state_dim, action_dim, sizes, output_dim=1):
    """Deterministic synthetic parameter init (shapes match FullyConnectedCritic)."""
    dims = [state_dim + action_dim] + list(sizes) + [output_dim]
    params = {}
    ks = jax.random.split(key, 2 * (len(dims) - 1))
    for i in range(len(dims) - 1):
        params[f"w{i + 1}"] = (
            jax.random.normal(ks[2 * i], (dims[i], dims[i + 1]), jnp.float32)
            * (1.0 / jnp.sqrt(dims[i]))
        )
        params[f"b{i + 1}"] = (
            jax.random.normal(ks[2 * i + 1], (dims[i + 1],), jnp.float32) * 0.01
        )
    return params


def _reference_forward(state, action, params):
    x = jnp.concatenate([state, action], axis=1)
    h1 = jnp.maximum(x @ params["w1"] + params["b1"], 0.0)
    h2 = jnp.maximum(h1 @ params["w2"] + params["b2"], 0.0)
    return h2 @ params["w3"] + params["b3"]


if __name__ == "__main__":
    # Shapes consistent with the critic: state_dim=8, action_dim=4,
    # hidden sizes [32, 16], scalar Q output.
    STATE_DIM, ACTION_DIM = 8, 4
    SIZES = [32, 16]

    key = jax.random.PRNGKey(0)
    k_state, k_action, k_params, k_state2, k_action2 = jax.random.split(key, 5)
    params = _init_params(k_params, STATE_DIM, ACTION_DIM, SIZES, output_dim=1)

    # ---- Test 1: tiny batch (B=2), f32 compute path -----------------------
    B = 2
    state = jax.random.normal(k_state, (B, STATE_DIM), jnp.float32)
    action = jax.random.normal(k_action, (B, ACTION_DIM), jnp.float32)
    ref = _reference_forward(state, action, params)

    prepped_f32 = prepare_params(params, compute_dtype=jnp.float32)
    out_f32 = jax.block_until_ready(
        fully_connected_critic_forward(state, action, prepped_f32)
    )
    assert out_f32.shape == (B, 1) and out_f32.dtype == jnp.float32
    assert jnp.allclose(out_f32, ref, atol=2e-3, rtol=2e-3), (out_f32, ref)

    # ---- Test 2: bf16 resident weights (in-kernel cast), f32 accumulation --
    prepped_bf16 = prepare_params(params, compute_dtype=jnp.bfloat16)
    out_bf16 = jax.block_until_ready(
        fully_connected_critic_forward(state, action, prepped_bf16)
    )
    assert out_bf16.shape == (B, 1) and out_bf16.dtype == jnp.float32
    assert jnp.allclose(out_bf16, ref, atol=8e-2, rtol=5e-2), (out_bf16, ref)

    # ---- Test 3: multi-tile grid + partial last tile (B=300, tile_b=128) ---
    B2 = 300
    state2 = jax.random.normal(k_state2, (B2, STATE_DIM), jnp.float32)
    action2 = jax.random.normal(k_action2, (B2, ACTION_DIM), jnp.float32)
    ref2 = _reference_forward(state2, action2, params)
    out2 = jax.block_until_ready(
        fully_connected_critic_forward(state2, action2, prepped_f32, tile_b=128)
    )
    assert out2.shape == (B2, 1)
    assert jnp.allclose(out2, ref2, atol=2e-3, rtol=2e-3)

    print("KERNEL_OK")
</pallas_src>

<mosaic_0001>
module attributes {stable_mosaic.version = 11 : i64} {
  func.func @_critic_kernel(%arg0: i32, %arg1: memref<12x2xf32, #tpu.memory_space<vmem>>, %arg2: memref<32x12xf32, #tpu.memory_space<vmem>>, %arg3: memref<32x1xf32, #tpu.memory_space<vmem>>, %arg4: memref<16x32xf32, #tpu.memory_space<vmem>>, %arg5: memref<16x1xf32, #tpu.memory_space<vmem>>, %arg6: memref<1x16xf32, #tpu.memory_space<vmem>>, %arg7: memref<1x1xf32, #tpu.memory_space<vmem>>, %arg8: memref<1x2xf32, #tpu.memory_space<vmem>>) attributes {dimension_semantics = [#tpu.dimension_semantics<parallel>], iteration_bounds = array<i64: 1>, scalar_prefetch = 0 : i64, scratch_operands = 0 : i64, tpu.core_type = #tpu.core_type<tc>, window_params = [{transform_indices = @transform_0, window_bounds = array<i64: 12, 2>}, {pipeline_mode = #tpu.pipeline_mode<synchronous>, transform_indices = @transform_1, window_bounds = array<i64: 32, 12>}, {pipeline_mode = #tpu.pipeline_mode<synchronous>, transform_indices = @transform_2, window_bounds = array<i64: 32, 1>}, {pipeline_mode = #tpu.pipeline_mode<synchronous>, transform_indices = @transform_3, window_bounds = array<i64: 16, 32>}, {pipeline_mode = #tpu.pipeline_mode<synchronous>, transform_indices = @transform_4, window_bounds = array<i64: 16, 1>}, {pipeline_mode = #tpu.pipeline_mode<synchronous>, transform_indices = @transform_5, window_bounds = array<i64: 1, 16>}, {pipeline_mode = #tpu.pipeline_mode<synchronous>, transform_indices = @transform_6, window_bounds = array<i64: 1, 1>}, {transform_indices = @transform_7, window_bounds = array<i64: 1, 2>}]} {
    %c0 = arith.constant 0 : index
    %c0_0 = arith.constant 0 : index
    %0 = vector.load %arg1[%c0, %c0_0] : memref<12x2xf32, #tpu.memory_space<vmem>>, vector<12x2xf32>
    %c0_1 = arith.constant 0 : index
    %c0_2 = arith.constant 0 : index
    %1 = vector.load %arg2[%c0_1, %c0_2] : memref<32x12xf32, #tpu.memory_space<vmem>>, vector<32x12xf32>
    %cst = arith.constant dense<0.000000e+00> : vector<32x2xf32>
    %2 = tpu.matmul %1, %0, %cst {dimension_numbers = #tpu.dot_dimension_numbers<[1], [0], [0], [1], [0, 0, 1, 1], [], []>} : vector<32x12xf32>, vector<12x2xf32>, vector<32x2xf32> -> vector<32x2xf32>
    %c0_3 = arith.constant 0 : index
    %c0_4 = arith.constant 0 : index
    %3 = vector.load %arg3[%c0_3, %c0_4] : memref<32x1xf32, #tpu.memory_space<vmem>>, vector<32x1xf32>
    %4 = vector.broadcast %3 : vector<32x1xf32> to vector<32x2xf32>
    %5 = arith.addf %2, %4 : vector<32x2xf32>
    %cst_5 = arith.constant 0.000000e+00 : f32
    %6 = vector.broadcast %cst_5 : f32 to vector<32x2xf32>
    %7 = arith.maximumf %5, %6 : vector<32x2xf32>
    %c0_6 = arith.constant 0 : index
    %c0_7 = arith.constant 0 : index
    %8 = vector.load %arg4[%c0_6, %c0_7] : memref<16x32xf32, #tpu.memory_space<vmem>>, vector<16x32xf32>
    %cst_8 = arith.constant dense<0.000000e+00> : vector<16x2xf32>
    %9 = tpu.matmul %8, %7, %cst_8 {dimension_numbers = #tpu.dot_dimension_numbers<[1], [0], [0], [1], [0, 0, 1, 1], [], []>} : vector<16x32xf32>, vector<32x2xf32>, vector<16x2xf32> -> vector<16x2xf32>
    %c0_9 = arith.constant 0 : index
    %c0_10 = arith.constant 0 : index
    %10 = vector.load %arg5[%c0_9, %c0_10] : memref<16x1xf32, #tpu.memory_space<vmem>>, vector<16x1xf32>
    %11 = vector.broadcast %10 : vector<16x1xf32> to vector<16x2xf32>
    %12 = arith.addf %9, %11 : vector<16x2xf32>
    %cst_11 = arith.constant 0.000000e+00 : f32
    %13 = vector.broadcast %cst_11 : f32 to vector<16x2xf32>
    %14 = arith.maximumf %12, %13 : vector<16x2xf32>
    %c0_12 = arith.constant 0 : index
    %c0_13 = arith.constant 0 : index
    %15 = vector.load %arg6[%c0_12, %c0_13] : memref<1x16xf32, #tpu.memory_space<vmem>>, vector<1x16xf32>
    %cst_14 = arith.constant dense<0.000000e+00> : vector<1x2xf32>
    %16 = tpu.matmul %15, %14, %cst_14 {dimension_numbers = #tpu.dot_dimension_numbers<[1], [0], [0], [1], [0, 0, 1, 1], [], []>} : vector<1x16xf32>, vector<16x2xf32>, vector<1x2xf32> -> vector<1x2xf32>
    %c0_15 = arith.constant 0 : index
    %c0_16 = arith.constant 0 : index
    %17 = vector.load %arg7[%c0_15, %c0_16] : memref<1x1xf32, #tpu.memory_space<vmem>>, vector<1x1xf32>
    %18 = vector.broadcast %17 : vector<1x1xf32> to vector<1x2xf32>
    %19 = arith.addf %16, %18 : vector<1x2xf32>
    %c0_17 = arith.constant 0 : index
    %c0_18 = arith.constant 0 : index
    %20 = vector.load %arg8[%c0_17, %c0_18] : memref<1x2xf32, #tpu.memory_space<vmem>>, vector<1x2xf32>
    tpu.vector_store %arg8[%c0_17, %c0_18], %19 {strides = array<i32>} : memref<1x2xf32, #tpu.memory_space<vmem>>, vector<1x2xf32>,
    return
  }
  func.func @transform_0(%arg0: i32) -> (i32, i32) {
    %c0_i32 = arith.constant 0 : i32
    %c0_i32_0 = arith.constant 0 : i32
    return %c0_i32, %arg0 : i32, i32
  }
  func.func @transform_1(%arg0: i32) -> (i32, i32) {
    %c0_i32 = arith.constant 0 : i32
    %c0_i32_0 = arith.constant 0 : i32
    %c0_i32_1 = arith.constant 0 : i32
    return %c0_i32, %c0_i32_0 : i32, i32
  }
  func.func @transform_2(%arg0: i32) -> (i32, i32) {
    %c0_i32 = arith.constant 0 : i32
    %c0_i32_0 = arith.constant 0 : i32
    %c0_i32_1 = arith.constant 0 : i32
    return %c0_i32, %c0_i32_0 : i32, i32
  }
  func.func @transform_3(%arg0: i32) -> (i32, i32) {
    %c0_i32 = arith.constant 0 : i32
    %c0_i32_0 = arith.constant 0 : i32
    %c0_i32_1 = arith.constant 0 : i32
    return %c0_i32, %c0_i32_0 : i32, i32
  }
  func.func @transform_4(%arg0: i32) -> (i32, i32) {
    %c0_i32 = arith.constant 0 : i32
    %c0_i32_0 = arith.constant 0 : i32
    %c0_i32_1 = arith.constant 0 : i32
    return %c0_i32, %c0_i32_0 : i32, i32
  }
  func.func @transform_5(%arg0: i32) -> (i32, i32) {
    %c0_i32 = arith.constant 0 : i32
    %c0_i32_0 = arith.constant 0 : i32
    %c0_i32_1 = arith.constant 0 : i32
    return %c0_i32, %c0_i32_0 : i32, i32
  }
  func.func @transform_6(%arg0: i32) -> (i32, i32) {
    %c0_i32 = arith.constant 0 : i32
    %c0_i32_0 = arith.constant 0 : i32
    %c0_i32_1 = arith.constant 0 : i32
    return %c0_i32, %c0_i32_0 : i32, i32
  }
  func.func @transform_7(%arg0: i32) -> (i32, i32) {
    %c0_i32 = arith.constant 0 : i32
    %c0_i32_0 = arith.constant 0 : i32
    return %c0_i32, %arg0 : i32, i32
  }
}

</mosaic_0001>

<llo_original>
// kernel: tpu_custom_call.1
$region0: #{tpu_custom_call.1}
  #allocation0 [shape = 'u32[]', space=smem, size = 0x4, offset = 0x4, fixed_abs, tag = 'smem constant byte address 0x4 - core index']
  #allocation1 [shape = 'u32[144,128]{1,0:T(1,128)}', space=vmem, size = 0x12000, scoped, tag = 'internal scratch']
  #allocation2 [shape = 'f32[1,1]{1,0:T(1,128)S(1)}', space=vmem, size = 0x200, scoped, tag = 'scoped memory for tpu_custom_call.1']
  %s0 = inlined_call_operand.vmem [shape: f32[12,2], index: 0, kind: input, shape index: {}]
  %s1 = inlined_call_operand.vmem [shape: f32[32,12], index: 1, kind: input, shape index: {}]
  %s2 = inlined_call_operand.vmem [shape: f32[32,1], index: 2, kind: input, shape index: {}]
  %s3 = inlined_call_operand.vmem [shape: f32[16,32], index: 3, kind: input, shape index: {}]
  %s4 = inlined_call_operand.vmem [shape: f32[16,1], index: 4, kind: input, shape index: {}]
  %s5 = inlined_call_operand.vmem [shape: f32[1,16], index: 5, kind: input, shape index: {}]
  %s6 = inlined_call_operand.<no memory space> [shape: f32[1,1], index: 6, kind: input, shape index: {}]
  %s7 = inlined_call_operand.hbm [shape: f32[1,2], index: 7, kind: output, shape index: {}]
  %s8 = sld [smem:[#allocation0]]
  $region38: #{tpu_custom_call.1} parent=0
    _
  %s10 = ssub.s32 1, %s8
  %s11 = scalar_select 0, %s10, %s8
  %v12 = vstv %s6
  %13 = vst [vmem:[#allocation2] sm:$0x1] %v12
  $region1: #{tpu_custom_call.1} parent=0
    #allocation3 [shape = 'u8[512]{0}', space=vmem, size = 0x400, scoped, tag = 'output window, operand 0, single buffered']
    #allocation4 [shape = 's32[1]{0}', space=sflag, size = 0x4, scoped, tag = 'scoped memory for tpu_custom_call.1']
    %14 = vsyncpa [#allocation4], 0
    // Predicated region
    $region2: #{tpu_custom_call.1} parent=1 // pred_check
      _
    $region3: #{tpu_custom_call.1} parent=1 // pred_check_branch
      %16 = sbr.rel (0) target = $region5
    $region4: #{tpu_custom_call.1} parent=1 // pred_region
      _
    $region5: #{tpu_custom_call.1} parent=1 // pred_fallthru
      _
    // Predicated region
    $region6: #{tpu_custom_call.1} parent=1 // pred_check
      _
    $region7: #{tpu_custom_call.1} parent=1 // pred_check_branch
      %18 = sbr.rel (0) target = $region9
    $region8: #{tpu_custom_call.1} parent=1 // pred_region
      _
    $region9: #{tpu_custom_call.1} parent=1 // pred_fallthru
      _
    // Predicated region
    $region10: #{tpu_custom_call.1} parent=1 // pred_check
      _
    $region11: #{tpu_custom_call.1} parent=1 // pred_check_branch
      %20 = sbr.rel (0) target = $region13
    $region12: #{tpu_custom_call.1} parent=1 // pred_region
      _
    $region13: #{tpu_custom_call.1} parent=1 // pred_fallthru
      _
    // Predicated region
    $region14: #{tpu_custom_call.1} parent=1 // pred_check
      _
    $region15: #{tpu_custom_call.1} parent=1 // pred_check_branch
      %22 = sbr.rel (0) target = $region17
    $region16: #{tpu_custom_call.1} parent=1 // pred_region
      _
    $region17: #{tpu_custom_call.1} parent=1 // pred_fallthru
      _
    // Predicated region
    $region18: #{tpu_custom_call.1} parent=1 // pred_check
      _
    $region19: #{tpu_custom_call.1} parent=1 // pred_check_branch
      %24 = sbr.rel (0) target = $region21
    $region20: #{tpu_custom_call.1} parent=1 // pred_region
      _
    $region21: #{tpu_custom_call.1} parent=1 // pred_fallthru
      _
    // Predicated region
    $region22: #{tpu_custom_call.1} parent=1 // pred_check
      _
    $region23: #{tpu_custom_call.1} parent=1 // pred_check_branch
      %26 = sbr.rel (0) target = $region25
    $region24: #{tpu_custom_call.1} parent=1 // pred_region
      _
    $region25: #{tpu_custom_call.1} parent=1 // pred_fallthru
      _
    // Predicated region
    $region26: #{tpu_custom_call.1} parent=1 // pred_check
      _
    $region27: #{tpu_custom_call.1} parent=1 // pred_check_branch
      %28 = sbr.rel (0) target = $region29
    $region28: #{tpu_custom_call.1} parent=1 // pred_region
      _
    $region29: #{tpu_custom_call.1} parent=1 // pred_fallthru
      _
    %v29 = vld [vmem:[%s0] sm:$0xff]
    %v30 = vld [vmem:[%s0 + $0x8] sm:$0xf]
    %v31 = vld [vmem:[%s1] sm:$0xff]
    %v32 = vld [vmem:[%s1 + $0x8] sm:$0xff]
    %v33 = vld [vmem:[%s1 + $0x10] sm:$0xff]
    %v34 = vld [vmem:[%s1 + $0x18] sm:$0xff]
    %v35 = vld [vmem:[%s2] sm:$0xff]
    %v36 = vld [vmem:[%s2 + $0x8] sm:$0xff]
    %v37 = vld [vmem:[%s2 + $0x10] sm:$0xff]
    %v38 = vld [vmem:[%s2 + $0x18] sm:$0xff]
    %40 = vset.pattern.permute.xlu0 0
    %41 = vperm.xlu0 %40, %v35
    %v42 = vpop.permute.xlu0 %41
    %45 = vset.pattern.permute.xlu0 0
    %46 = vperm.xlu0 %45, %v36
    %v47 = vpop.permute.xlu0 %46
    %50 = vset.pattern.permute.xlu0 0
    %51 = vperm.xlu0 %50, %v37
    %v52 = vpop.permute.xlu0 %51
    %55 = vset.pattern.permute.xlu0 0
    %56 = vperm.xlu0 %55, %v38
    %v57 = vpop.permute.xlu0 %56
    %vm59 = vcmask 97280
    %v61 = vsel %vm59, %v31, 0
    %v64 = vsel %vm59, %v32, 0
    %v67 = vsel %vm59, %v33, 0
    %v70 = vsel %vm59, %v34, 0
    %vm72 = vcmask 1043456
    %v74 = vsel %vm72, %v30, 0
    %76 = vmatprep.subr.mxu0 0.0
    %77 = vmatpush1.msra.mxu0 %v29
    %78 = vmatprep.subr.mxu0 0.0
    %79 = vmatpush1.msra.mxu0 %v74
    %80 = vmatprep.subr.mxu0 0.0
    %81 = vmatpush1.msra.mxu0 0.0
    %82 = vmatprep.subr.mxu0 0.0
    %83 = vmatpush1.msra.mxu0 0.0
    %84 = vmatprep.subr.mxu0 0.0
    %85 = vmatpush1.msra.mxu0 0.0
    %86 = vmatprep.subr.mxu0 0.0
    %87 = vmatpush1.msra.mxu0 0.0
    %88 = vmatprep.subr.mxu0 0.0
    %89 = vmatpush1.msra.mxu0 0.0
    %90 = vmatprep.subr.mxu0 0.0
    %91 = vmatpush1.msra.mxu0 0.0
    %92 = vmatprep.subr.mxu0 0.0
    %93 = vmatpush1.msra.mxu0 0.0
    %94 = vmatprep.subr.mxu0 0.0
    %95 = vmatpush1.msra.mxu0 0.0
    %96 = vmatprep.subr.mxu0 0.0
    %97 = vmatpush1.msra.mxu0 0.0
    %98 = vmatprep.subr.mxu0 0.0
    %99 = vmatpush1.msra.mxu0 0.0
    %100 = vmatprep.subr.mxu0 0.0
    %101 = vmatpush1.msra.mxu0 0.0
    %102 = vmatprep.subr.mxu0 0.0
    %103 = vmatpush1.msra.mxu0 0.0
    %104 = vmatprep.subr.mxu0 0.0
    %105 = vmatpush1.msra.mxu0 0.0
    %106 = vmatprep.subr.mxu0 0.0
    %107 = vmatpush1.msra.mxu0 0.0
    %108 = vmatprep.subr.mxu0 0.0
    %109 = vmatpush1.msra.mxu0 0.0
    %110 = vmatprep.subr.mxu0 0.0
    %111 = vmatpush1.msra.mxu0 0.0
    %112 = vmatprep.subr.mxu0 0.0
    %113 = vmatpush1.msra.mxu0 0.0
    %114 = vmatprep.subr.mxu0 0.0
    %115 = vmatpush1.msra.mxu0 0.0
    %116 = vmatprep.subr.mxu0 0.0
    %117 = vmatpush1.msra.mxu0 0.0
    %118 = vmatprep.subr.mxu0 0.0
    %119 = vmatpush1.msra.mxu0 0.0
    %120 = vmatprep.subr.mxu0 0.0
    %121 = vmatpush1.msra.mxu0 0.0
    %122 = vmatprep.subr.mxu0 0.0
    %123 = vmatpush1.msra.mxu0 0.0
    %124 = vmatprep.subr.mxu0 0.0
    %125 = vmatpush1.msra.mxu0 0.0
    %126 = vmatprep.subr.mxu0 0.0
    %127 = vmatpush1.msra.mxu0 0.0
    %128 = vmatprep.subr.mxu0 0.0
    %129 = vmatpush1.msra.mxu0 0.0
    %130 = vmatprep.subr.mxu0 0.0
    %131 = vmatpush1.msra.mxu0 0.0
    %132 = vmatprep.subr.mxu0 0.0
    %133 = vmatpush1.msra.mxu0 0.0
    %134 = vmatprep.subr.mxu0 0.0
    %135 = vmatpush1.msra.mxu0 0.0
    %136 = vmatprep.subr.mxu0 0.0
    %137 = vmatpush1.msra.mxu0 0.0
    %138 = vmatprep.subr.mxu0 0.0
    %139 = vmatpush1.msra.mxu0 0.0
    %140 = vmatprep.mubr.f32.mxu0 0.0
    %141 = vmatmul.mubr.f32.gmra.mrb[0].mxu0 %v61
    %v142 = vpop.f32.mrb[0].mxu0
    %v143 = vadd.f32 %v42, %v142
    %v144 = vpop.f32.mrb[0].mxu0
    %145 = vmatprep.mubr.f32.mxu0 0.0
    %146 = vmatmul.mubr.f32.gmra.mrb[0].mxu0 %v64
    %v147 = vpop.f32.mrb[0].mxu0
    %v148 = vadd.f32 %v47, %v147
    %v149 = vpop.f32.mrb[0].mxu0
    %150 = vmatprep.mubr.f32.mxu0 0.0
    %151 = vmatmul.mubr.f32.gmra.mrb[0].mxu0 %v67
    %v152 = vpop.f32.mrb[0].mxu0
    %v153 = vadd.f32 %v52, %v152
    %v154 = vpop.f32.mrb[0].mxu0
    %155 = vmatprep.mubr.f32.mxu0 0.0
    %156 = vmatmul.mubr.f32.gmra.mrb[0].mxu0 %v70
    %v157 = vpop.f32.mrb[0].mxu0
    %v158 = vadd.f32 %v57, %v157
    %v159 = vpop.f32.mrb[0].mxu0
    %160 = vdwg.mxu0
    %v161 = vmax.f32 %v143, 0.0
    %v162 = vmax.f32 %v148, 0.0
    %v163 = vmax.f32 %v153, 0.0
    %v164 = vmax.f32 %v158, 0.0
    %v165 = vld [vmem:[%s3] sm:$0xff]
    %v166 = vld [vmem:[%s3 + $0x8] sm:$0xff]
    %v167 = vld [vmem:[%s4] sm:$0xff]
    %v168 = vld [vmem:[%s4 + $0x8] sm:$0xff]
    %170 = vset.pattern.permute.xlu0 0
    %171 = vperm.xlu0 %170, %v167
    %v172 = vpop.permute.xlu0 %171
    %175 = vset.pattern.permute.xlu0 0
    %176 = vperm.xlu0 %175, %v168
    %v177 = vpop.permute.xlu0 %176
    %vm179 = vcmask 261120
    %v181 = vsel %vm179, %v165, 0
    %v184 = vsel %vm179, %v166, 0
    %186 = vmatprep.subr.mxu0 0.0
    %187 = vmatpush1.msra.mxu0 %v161
    %188 = vmatprep.subr.mxu0 0.0
    %189 = vmatpush1.msra.mxu0 %v162
    %190 = vmatprep.subr.mxu0 0.0
    %191 = vmatpush1.msra.mxu0 %v163
    %192 = vmatprep.subr.mxu0 0.0
    %193 = vmatpush1.msra.mxu0 %v164
    %194 = vmatprep.subr.mxu0 0.0
    %195 = vmatpush1.msra.mxu0 0.0
    %196 = vmatprep.subr.mxu0 0.0
    %197 = vmatpush1.msra.mxu0 0.0
    %198 = vmatprep.subr.mxu0 0.0
    %199 = vmatpush1.msra.mxu0 0.0
    %200 = vmatprep.subr.mxu0 0.0
    %201 = vmatpush1.msra.mxu0 0.0
    %202 = vmatprep.subr.mxu0 0.0
    %203 = vmatpush1.msra.mxu0 0.0
    %204 = vmatprep.subr.mxu0 0.0
    %205 = vmatpush1.msra.mxu0 0.0
    %206 = vmatprep.subr.mxu0 0.0
    %207 = vmatpush1.msra.mxu0 0.0
    %208 = vmatprep.subr.mxu0 0.0
    %209 = vmatpush1.msra.mxu0 0.0
    %210 = vmatprep.subr.mxu0 0.0
    %211 = vmatpush1.msra.mxu0 0.0
    %212 = vmatprep.subr.mxu0 0.0
    %213 = vmatpush1.msra.mxu0 0.0
    %214 = vmatprep.subr.mxu0 0.0
    %215 = vmatpush1.msra.mxu0 0.0
    %216 = vmatprep.subr.mxu0 0.0
    %217 = vmatpush1.msra.mxu0 0.0
    %218 = vmatprep.subr.mxu0 0.0
    %219 = vmatpush1.msra.mxu0 0.0
    %220 = vmatprep.subr.mxu0 0.0
    %221 = vmatpush1.msra.mxu0 0.0
    %222 = vmatprep.subr.mxu0 0.0
    %223 = vmatpush1.msra.mxu0 0.0
    %224 = vmatprep.subr.mxu0 0.0
    %225 = vmatpush1.msra.mxu0 0.0
    %226 = vmatprep.subr.mxu0 0.0
    %227 = vmatpush1.msra.mxu0 0.0
    %228 = vmatprep.subr.mxu0 0.0
    %229 = vmatpush1.msra.mxu0 0.0
    %230 = vmatprep.subr.mxu0 0.0
    %231 = vmatpush1.msra.mxu0 0.0
    %232 = vmatprep.subr.mxu0 0.0
    %233 = vmatpush1.msra.mxu0 0.0
    %234 = vmatprep.subr.mxu0 0.0
    %235 = vmatpush1.msra.mxu0 0.0
    %236 = vmatprep.subr.mxu0 0.0
    %237 = vmatpush1.msra.mxu0 0.0
    %238 = vmatprep.subr.mxu0 0.0
    %239 = vmatpush1.msra.mxu0 0.0
    %240 = vmatprep.subr.mxu0 0.0
    %241 = vmatpush1.msra.mxu0 0.0
    %242 = vmatprep.subr.mxu0 0.0
    %243 = vmatpush1.msra.mxu0 0.0
    %244 = vmatprep.subr.mxu0 0.0
    %245 = vmatpush1.msra.mxu0 0.0
    %246 = vmatprep.subr.mxu0 0.0
    %247 = vmatpush1.msra.mxu0 0.0
    %248 = vmatprep.subr.mxu0 0.0
    %249 = vmatpush1.msra.mxu0 0.0
    %250 = vmatprep.mubr.f32.mxu0 0.0
    %251 = vmatmul.mubr.f32.gmra.mrb[0].mxu0 %v181
    %v252 = vpop.f32.mrb[0].mxu0
    %v253 = vadd.f32 %v172, %v252
    %v254 = vpop.f32.mrb[0].mxu0
    %255 = vmatprep.mubr.f32.mxu0 0.0
    %256 = vmatmul.mubr.f32.gmra.mrb[0].mxu0 %v184
    %v257 = vpop.f32.mrb[0].mxu0
    %v258 = vadd.f32 %v177, %v257
    %v259 = vpop.f32.mrb[0].mxu0
    %260 = vdwg.mxu0
    %v261 = vmax.f32 %v253, 0.0
    %v262 = vmax.f32 %v258, 0.0
    %v263 = vld [vmem:[%s5] sm:$0x1]
    %v264 = vld [vmem:[#allocation2] sm:$0x1]
    %266 = vset.pattern.permute.xlu0 0
    %267 = vperm.xlu0 %266, %v264
    %v268 = vpop.permute.xlu0 %267
    %v270 = vlaneseq
    %v271 = vshrl.u32 %v270, 7
    %v272 = vsub.s32 0, %v271
    %v273 = vrot.slane %v268, %v272
    %vm274 = vcmask 130048
    %v276 = vsel %vm274, %v263, 0
    %278 = vmatprep.subr.mxu0 0.0
    %279 = vmatpush1.msra.mxu0 %v261
    %280 = vmatprep.subr.mxu0 0.0
    %281 = vmatpush1.msra.mxu0 %v262
    %282 = vmatprep.subr.mxu0 0.0
    %283 = vmatpush1.msra.mxu0 0.0
    %284 = vmatprep.subr.mxu0 0.0
    %285 = vmatpush1.msra.mxu0 0.0
    %286 = vmatprep.subr.mxu0 0.0
    %287 = vmatpush1.msra.mxu0 0.0
    %288 = vmatprep.subr.mxu0 0.0
    %289 = vmatpush1.msra.mxu0 0.0
    %290 = vmatprep.subr.mxu0 0.0
    %291 = vmatpush1.msra.mxu0 0.0
    %292 = vmatprep.subr.mxu0 0.0
    %293 = vmatpush1.msra.mxu0 0.0
    %294 = vmatprep.subr.mxu0 0.0
    %295 = vmatpush1.msra.mxu0 0.0
    %296 = vmatprep.subr.mxu0 0.0
    %297 = vmatpush1.msra.mxu0 0.0
    %298 = vmatprep.subr.mxu0 0.0
    %299 = vmatpush1.msra.mxu0 0.0
    %300 = vmatprep.subr.mxu0 0.0
    %301 = vmatpush1.msra.mxu0 0.0
    %302 = vmatprep.subr.mxu0 0.0
    %303 = vmatpush1.msra.mxu0 0.0
    %304 = vmatprep.subr.mxu0 0.0
    %305 = vmatpush1.msra.mxu0 0.0
    %306 = vmatprep.subr.mxu0 0.0
    %307 = vmatpush1.msra.mxu0 0.0
    %308 = vmatprep.subr.mxu0 0.0
    %309 = vmatpush1.msra.mxu0 0.0
    %310 = vmatprep.subr.mxu0 0.0
    %311 = vmatpush1.msra.mxu0 0.0
    %312 = vmatprep.subr.mxu0 0.0
    %313 = vmatpush1.msra.mxu0 0.0
    %314 = vmatprep.subr.mxu0 0.0
    %315 = vmatpush1.msra.mxu0 0.0
    %316 = vmatprep.subr.mxu0 0.0
    %317 = vmatpush1.msra.mxu0 0.0
    %318 = vmatprep.subr.mxu0 0.0
    %319 = vmatpush1.msra.mxu0 0.0
    %320 = vmatprep.subr.mxu0 0.0
    %321 = vmatpush1.msra.mxu0 0.0
    %322 = vmatprep.subr.mxu0 0.0
    %323 = vmatpush1.msra.mxu0 0.0
    %324 = vmatprep.subr.mxu0 0.0
    %325 = vmatpush1.msra.mxu0 0.0
    %326 = vmatprep.subr.mxu0 0.0
    %327 = vmatpush1.msra.mxu0 0.0
    %328 = vmatprep.subr.mxu0 0.0
    %329 = vmatpush1.msra.mxu0 0.0
    %330 = vmatprep.subr.mxu0 0.0
    %331 = vmatpush1.msra.mxu0 0.0
    %332 = vmatprep.subr.mxu0 0.0
    %333 = vmatpush1.msra.mxu0 0.0
    %334 = vmatprep.subr.mxu0 0.0
    %335 = vmatpush1.msra.mxu0 0.0
    %336 = vmatprep.subr.mxu0 0.0
    %337 = vmatpush1.msra.mxu0 0.0
    %338 = vmatprep.subr.mxu0 0.0
    %339 = vmatpush1.msra.mxu0 0.0
    %340 = vmatprep.subr.mxu0 0.0
    %341 = vmatpush1.msra.mxu0 0.0
    %342 = vmatprep.mubr.f32.mxu0 0.0
    %343 = vmatmul.mubr.f32.gmra.mrb[0].mxu0 %v276
    %v344 = vpop.f32.mrb[0].mxu0
    %v345 = vadd.f32 %v273, %v344
    %v346 = vpop.f32.mrb[0].mxu0
    %347 = vdwg.mxu0
    %vm348 = vcmask 8192
    %349 = vst.msk [vmem:[#allocation3] sm:$0x1] %vm348, %v345
    // Predicated region
    $region30: #{tpu_custom_call.1} parent=1 // pred_check
      _
    $region31: #{tpu_custom_call.1} parent=1 // pred_check_branch
      %351 = sbr.rel (0) target = $region33
    $region32: #{tpu_custom_call.1} parent=1 // pred_region
      %s353 = ssub.s32 16, 16
      %354 = vsyncadd [#allocation4], %s353
      %s356 = sshll.u32 [#allocation3], 4
      %s357 = int_to_ptr.vmem [resolvable:$true] %s356
      %359 = dma.vmem_to_hbm [thread:$0]  %s357, 16, %s7, [#allocation4]
    $region33: #{tpu_custom_call.1} parent=1 // pred_fallthru
      _
    // Predicated region
    $region34: #{tpu_custom_call.1} parent=1 // pred_check
      _
    $region35: #{tpu_custom_call.1} parent=1 // pred_check_branch
      %361 = sbr.rel (0) target = $region37
    $region36: #{tpu_custom_call.1} parent=1 // pred_region
      %362 = dma.done [#allocation4], 16
    $region37: #{tpu_custom_call.1} parent=1 // pred_fallthru
      _
    %363 = vsyncpa [#allocation4], 1

</llo_original>
